<compile_context>
chip_gen: v7x
topology: tpu7x:2x2x1
jax: 0.10.0
libtpu: 0.0.40
codegen_flags: <defaults>
</compile_context>

<pallas_src>
import math

import jax
import jax.numpy as jnp
from jax.experimental import pallas as pl
from jax.experimental.pallas import tpu as pltpu


LANE = 128
SUBLANE = 8


def _round_up(n, m):
    return (n + m - 1) // m * m


def mlp_kernel(x_ref, params_ref, o_ref):
    # x_ref:      (br, 128)  -- batch, sublane+lane dense
    # params_ref: (H, 4)     -- columns = [w1, b1, w2, b2(broadcast)]
    # o_ref:      (br, 128)
    p = params_ref[...]                      # (H, 4)
    w1 = p[:, 0:1].reshape(-1, 1, 1)         # (H, 1, 1)
    b1 = p[:, 1:2].reshape(-1, 1, 1)         # (H, 1, 1)
    w2 = p[:, 2:3].reshape(-1, 1, 1)         # (H, 1, 1)
    b2 = p[0:1, 3:4]                         # (1, 1)

    x = x_ref[...]                           # (br, 128)

    # hidden = sigmoid(w1 * x + b1), one EUP tanh per element.
    z = w1 * x[None, :, :] + b1              # (H, br, 128) -- VPU broadcast
    h = 0.5 * jnp.tanh(0.5 * z) + 0.5        # (H, br, 128) -- EUP

    # predict = sum_j w2[j] * h[j] + b2  -- reduce over the leading axis:
    # plain VPU vreg adds, no cross-lane/XLU work.
    y = jnp.sum(w2 * h, axis=0) + b2         # (br, 128)

    o_ref[...] = y.astype(o_ref.dtype)


def mlp_forward(x, w1, b1, w2, b2):
    """Forward pass of Net with PyTorch-layout parameters.

    x:  (B, F)  with F == 1
    w1: (H, F)  hidden.weight     b1: (H,)  hidden.bias
    w2: (O, H)  predict.weight    b2: (O,)  predict.bias  with O == 1
    Returns (B, O) in x.dtype.
    """
    B, F = x.shape
    H = w1.shape[0]
    O = w2.shape[0]
    assert F == 1 and O == 1, "kernel is specialized to n_feature=1, n_output=1"

    out_dtype = x.dtype
    cdt = jnp.float32  # force f32 compute (v5e EUP has no bf16 path)

    # Pack all parameters into one small VMEM block: single resident DMA.
    params = jnp.stack(
        [
            w1[:, 0],                    # hidden weight column
            b1,                          # hidden bias
            w2[0, :],                    # predict weight row
            jnp.full((H,), b2[0]),       # predict bias (broadcast)
        ],
        axis=1,
    ).astype(cdt)                        # (H, 4)

    # --- batch layout: pad to lane/sublane-dense (rows, 128) ---------------
    xf = x.reshape(B).astype(cdt)
    Bp = _round_up(max(B, LANE), LANE)
    rows = Bp // LANE
    if rows <= SUBLANE:
        # Single block equal to the full array (block == array dims is OK even
        # when rows < 8).
        br = rows
    else:
        # Tile in (8, 128) multiples: bt = 1024 batch elements per step keeps
        # the (H, 8, 128) f32 hidden at 128 KiB (H=32) and yields a grid >= 2
        # so the "parallel" axis can shard across v7x's two TensorCores.
        rows = _round_up(rows, SUBLANE)
        Bp = rows * LANE
        br = SUBLANE

    x_pad = jnp.pad(xf, (0, Bp - B))
    x2d = x_pad.reshape(rows, LANE)
    grid = (rows // br,)

    cost = pl.CostEstimate(
        flops=4 * H * Bp,
        transcendentals=H * Bp,
        bytes_accessed=8 * Bp + 16 * H,
    )

    out = pl.pallas_call(
        mlp_kernel,
        out_shape=jax.ShapeDtypeStruct((rows, LANE), cdt),
        grid=grid,
        in_specs=[
            pl.BlockSpec((br, LANE), lambda i: (i, 0)),   # batch tile
            pl.BlockSpec((H, 4), lambda i: (0, 0)),       # params, resident
        ],
        out_specs=pl.BlockSpec((br, LANE), lambda i: (i, 0)),
        compiler_params=pltpu.CompilerParams(
            dimension_semantics=("parallel",)),
        cost_estimate=cost,
    )(x2d, params)

    return out.reshape(Bp)[:B].reshape(B, O).astype(out_dtype)


def init_linear(key, fan_in, fan_out, dtype=jnp.float32):
    # Mirrors torch.nn.Linear default init: U(-1/sqrt(fan_in), 1/sqrt(fan_in)),
    # stored in PyTorch layout: weight (out, in), bias (out,).
    kw, kb = jax.random.split(key)
    bound = 1.0 / math.sqrt(fan_in)
    w = jax.random.uniform(kw, (fan_out, fan_in), dtype, -bound, bound)
    b = jax.random.uniform(kb, (fan_out,), dtype, -bound, bound)
    return w, b


def _ref_forward(x, w1, b1, w2, b2):
    return jax.nn.sigmoid(x @ w1.T + b1[None, :]) @ w2.T + b2[None, :]


if __name__ == "__main__":
    steps = 64          # matches `steps = 64` / linspace input in the script
    n_feature = 1
    n_hidden = 32
    n_output = 1

    key = jax.random.PRNGKey(0)
    k1, k2 = jax.random.split(key)
    w1, b1 = init_linear(k1, n_feature, n_hidden)
    w2, b2 = init_linear(k2, n_hidden, n_output)

    # x = linspace(0, 1, steps) as a (steps, 1) column of features.
    x = jnp.linspace(0.0, 1.0, steps, dtype=jnp.float32).reshape(steps, n_feature)

    out = mlp_forward(x, w1, b1, w2, b2)
    jax.block_until_ready(out)

    ref = _ref_forward(x, w1, b1, w2, b2)
    assert out.shape == (steps, n_output)
    assert jnp.allclose(out, ref, atol=1e-5, rtol=1e-5), (
        f"max abs err = {jnp.max(jnp.abs(out - ref))}")

    # Exercise the tiled large-batch path (grid > 1, (8, 128) blocks).
    xb = jnp.linspace(-2.0, 2.0, 4096, dtype=jnp.float32).reshape(4096, n_feature)
    out_b = mlp_forward(xb, w1, b1, w2, b2)
    jax.block_until_ready(out_b)
    ref_b = _ref_forward(xb, w1, b1, w2, b2)
    assert jnp.allclose(out_b, ref_b, atol=1e-5, rtol=1e-5), (
        f"max abs err (tiled) = {jnp.max(jnp.abs(out_b - ref_b))}")

    print("KERNEL_OK")
</pallas_src>

<mosaic_0001>
module attributes {stable_mosaic.version = 11 : i64} {
  func.func @mlp_kernel(%arg0: i32, %arg1: memref<1x128xf32, #tpu.memory_space<vmem>>, %arg2: memref<32x4xf32, #tpu.memory_space<vmem>>, %arg3: memref<1x128xf32, #tpu.memory_space<vmem>>) attributes {dimension_semantics = [#tpu.dimension_semantics<parallel>], iteration_bounds = array<i64: 1>, scalar_prefetch = 0 : i64, scratch_operands = 0 : i64, tpu.core_type = #tpu.core_type<tc>, window_params = [{transform_indices = @transform_0, window_bounds = array<i64: 1, 128>}, {pipeline_mode = #tpu.pipeline_mode<synchronous>, transform_indices = @transform_1, window_bounds = array<i64: 32, 4>}, {transform_indices = @transform_2, window_bounds = array<i64: 1, 128>}]} {
    %c0 = arith.constant 0 : index
    %c0_0 = arith.constant 0 : index
    %0 = vector.load %arg2[%c0, %c0_0] : memref<32x4xf32, #tpu.memory_space<vmem>>, vector<32x4xf32>
    %1 = vector.extract_strided_slice %0 {offsets = [0, 0], sizes = [32, 1], strides = [1, 1]} : vector<32x4xf32> to vector<32x1xf32>
    %2 = vector.shape_cast %1 : vector<32x1xf32> to vector<32x1x1xf32>
    %3 = vector.extract_strided_slice %0 {offsets = [0, 1], sizes = [32, 1], strides = [1, 1]} : vector<32x4xf32> to vector<32x1xf32>
    %4 = vector.shape_cast %3 : vector<32x1xf32> to vector<32x1x1xf32>
    %5 = vector.extract_strided_slice %0 {offsets = [0, 2], sizes = [32, 1], strides = [1, 1]} : vector<32x4xf32> to vector<32x1xf32>
    %6 = vector.shape_cast %5 : vector<32x1xf32> to vector<32x1x1xf32>
    %7 = vector.extract_strided_slice %0 {offsets = [0, 3], sizes = [1, 1], strides = [1, 1]} : vector<32x4xf32> to vector<1x1xf32>
    %c0_1 = arith.constant 0 : index
    %c0_2 = arith.constant 0 : index
    %8 = vector.load %arg1[%c0_1, %c0_2] : memref<1x128xf32, #tpu.memory_space<vmem>>, vector<1x128xf32>
    %9 = vector.shape_cast %8 : vector<1x128xf32> to vector<1x1x128xf32>
    %10 = vector.broadcast %2 : vector<32x1x1xf32> to vector<32x1x128xf32>
    %11 = vector.broadcast %9 : vector<1x1x128xf32> to vector<32x1x128xf32>
    %12 = arith.mulf %10, %11 : vector<32x1x128xf32>
    %13 = vector.broadcast %4 : vector<32x1x1xf32> to vector<32x1x128xf32>
    %14 = arith.addf %12, %13 : vector<32x1x128xf32>
    %cst = arith.constant 5.000000e-01 : f32
    %15 = vector.broadcast %cst : f32 to vector<32x1x128xf32>
    %16 = arith.mulf %15, %14 : vector<32x1x128xf32>
    %17 = math.tanh %16 : vector<32x1x128xf32>
    %cst_3 = arith.constant 5.000000e-01 : f32
    %18 = vector.broadcast %cst_3 : f32 to vector<32x1x128xf32>
    %19 = arith.mulf %18, %17 : vector<32x1x128xf32>
    %cst_4 = arith.constant 5.000000e-01 : f32
    %20 = vector.broadcast %cst_4 : f32 to vector<32x1x128xf32>
    %21 = arith.addf %19, %20 : vector<32x1x128xf32>
    %22 = vector.broadcast %6 : vector<32x1x1xf32> to vector<32x1x128xf32>
    %23 = arith.mulf %22, %21 : vector<32x1x128xf32>
    %cst_5 = arith.constant dense<0.000000e+00> : vector<1x128xf32>
    %24 = vector.multi_reduction <add>, %23, %cst_5 [0] : vector<32x1x128xf32> to vector<1x128xf32>
    %25 = vector.broadcast %7 : vector<1x1xf32> to vector<1x128xf32>
    %26 = arith.addf %24, %25 : vector<1x128xf32>
    %c0_6 = arith.constant 0 : index
    %c0_7 = arith.constant 0 : index
    %27 = vector.load %arg3[%c0_6, %c0_7] : memref<1x128xf32, #tpu.memory_space<vmem>>, vector<1x128xf32>
    tpu.vector_store %arg3[%c0_6, %c0_7], %26 {strides = array<i32>} : memref<1x128xf32, #tpu.memory_space<vmem>>, vector<1x128xf32>,
    return
  }
  func.func @transform_0(%arg0: i32) -> (i32, i32) {
    %c0_i32 = arith.constant 0 : i32
    %c0_i32_0 = arith.constant 0 : i32
    return %arg0, %c0_i32 : i32, i32
  }
  func.func @transform_1(%arg0: i32) -> (i32, i32) {
    %c0_i32 = arith.constant 0 : i32
    %c0_i32_0 = arith.constant 0 : i32
    %c0_i32_1 = arith.constant 0 : i32
    return %c0_i32, %c0_i32_0 : i32, i32
  }
  func.func @transform_2(%arg0: i32) -> (i32, i32) {
    %c0_i32 = arith.constant 0 : i32
    %c0_i32_0 = arith.constant 0 : i32
    return %arg0, %c0_i32 : i32, i32
  }
}

</mosaic_0001>

<llo_original>
// kernel: tpu_custom_call.1
$region0: #{tpu_custom_call.1}
  #allocation0 [shape = 'u32[]', space=smem, size = 0x4, offset = 0x4, fixed_abs, tag = 'smem constant byte address 0x4 - core index']
  #allocation1 [shape = 'u32[144,128]{1,0:T(1,128)}', space=vmem, size = 0x12000, scoped, tag = 'internal scratch']
  %s0 = inlined_call_operand.vmem [shape: f32[1,128], index: 0, kind: input, shape index: {}]
  %s1 = inlined_call_operand.vmem [shape: f32[32,4], index: 1, kind: input, shape index: {}]
  %s2 = inlined_call_operand.hbm [shape: f32[1,128], index: 2, kind: output, shape index: {}]
  %s3 = sld [smem:[#allocation0]]
  $region18: #{tpu_custom_call.1} parent=0
    _
  %s5 = ssub.s32 1, %s3
  %s6 = scalar_select 0, %s5, %s3
  $region1: #{tpu_custom_call.1} parent=0
    #allocation2 [shape = 'u8[512]{0}', space=vmem, size = 0x400, scoped, tag = 'output window, operand 0, single buffered']
    #allocation3 [shape = 's32[1]{0}', space=sflag, size = 0x4, scoped, tag = 'scoped memory for tpu_custom_call.1']
    %7 = vsyncpa [#allocation3], 0
    // Predicated region
    $region2: #{tpu_custom_call.1} parent=1 // pred_check
      _
    $region3: #{tpu_custom_call.1} parent=1 // pred_check_branch
      %9 = sbr.rel (0) target = $region5
    $region4: #{tpu_custom_call.1} parent=1 // pred_region
      _
    $region5: #{tpu_custom_call.1} parent=1 // pred_fallthru
      _
    // Predicated region
    $region6: #{tpu_custom_call.1} parent=1 // pred_check
      _
    $region7: #{tpu_custom_call.1} parent=1 // pred_check_branch
      %11 = sbr.rel (0) target = $region9
    $region8: #{tpu_custom_call.1} parent=1 // pred_region
      _
    $region9: #{tpu_custom_call.1} parent=1 // pred_fallthru
      _
    %v12 = vld [vmem:[%s1] sm:$0xff]
    %v13 = vld [vmem:[%s1 + $0x8] sm:$0xff]
    %v14 = vld [vmem:[%s1 + $0x10] sm:$0xff]
    %v15 = vld [vmem:[%s1 + $0x18] sm:$0xff]
    %v20 = vcombine.high %v12, %v12
    %v22 = vunpack.c.l.s4 1966171168
    %v23 = vunpack.c.0.s8 %v22
    %v24 = vlaneseq
    %v25 = vshrl.u32 %v24, 7
    %v26 = vsub.s32 %v23, %v25
    %v27 = vrot.slane %v12, %v26
    %v29 = vunpack.c.l.s4 1966171168
    %v30 = vunpack.c.0.s8 %v29
    %v31 = vlaneseq
    %v32 = vshrl.u32 %v31, 7
    %v33 = vsub.s32 %v30, %v32
    %v34 = vrot.slane %v20, %v33
    %v35 = vcombine.high %v27, %v27
    %v36 = vcombine.high %v34, %v34
    %v38 = vunpack.c.l.s4 1966171168
    %v39 = vunpack.c.0.s8 %v38
    %v40 = vlaneseq
    %v41 = vshrl.u32 %v40, 7
    %v42 = vsub.s32 %v39, %v41
    %v43 = vrot.slane %v27, %v42
    %v45 = vunpack.c.l.s4 1966171168
    %v46 = vunpack.c.0.s8 %v45
    %v47 = vlaneseq
    %v48 = vshrl.u32 %v47, 7
    %v49 = vsub.s32 %v46, %v48
    %v50 = vrot.slane %v34, %v49
    %v52 = vunpack.c.l.s4 1966171168
    %v53 = vunpack.c.0.s8 %v52
    %v54 = vlaneseq
    %v55 = vshrl.u32 %v54, 7
    %v56 = vsub.s32 %v53, %v55
    %v57 = vrot.slane %v35, %v56
    %v59 = vunpack.c.l.s4 1966171168
    %v60 = vunpack.c.0.s8 %v59
    %v61 = vlaneseq
    %v62 = vshrl.u32 %v61, 7
    %v63 = vsub.s32 %v60, %v62
    %v64 = vrot.slane %v36, %v63
    %v65 = vcombine.high %v43, %v43
    %v66 = vcombine.high %v50, %v50
    %v67 = vcombine.high %v57, %v57
    %v68 = vcombine.high %v64, %v64
    %v69 = vcombine.high %v13, %v13
    %v71 = vunpack.c.l.s4 1966171168
    %v72 = vunpack.c.0.s8 %v71
    %v73 = vlaneseq
    %v74 = vshrl.u32 %v73, 7
    %v75 = vsub.s32 %v72, %v74
    %v76 = vrot.slane %v13, %v75
    %v78 = vunpack.c.l.s4 1966171168
    %v79 = vunpack.c.0.s8 %v78
    %v80 = vlaneseq
    %v81 = vshrl.u32 %v80, 7
    %v82 = vsub.s32 %v79, %v81
    %v83 = vrot.slane %v69, %v82
    %v84 = vcombine.high %v76, %v76
    %v85 = vcombine.high %v83, %v83
    %v87 = vunpack.c.l.s4 1966171168
    %v88 = vunpack.c.0.s8 %v87
    %v89 = vlaneseq
    %v90 = vshrl.u32 %v89, 7
    %v91 = vsub.s32 %v88, %v90
    %v92 = vrot.slane %v76, %v91
    %v94 = vunpack.c.l.s4 1966171168
    %v95 = vunpack.c.0.s8 %v94
    %v96 = vlaneseq
    %v97 = vshrl.u32 %v96, 7
    %v98 = vsub.s32 %v95, %v97
    %v99 = vrot.slane %v83, %v98
    %v101 = vunpack.c.l.s4 1966171168
    %v102 = vunpack.c.0.s8 %v101
    %v103 = vlaneseq
    %v104 = vshrl.u32 %v103, 7
    %v105 = vsub.s32 %v102, %v104
    %v106 = vrot.slane %v84, %v105
    %v108 = vunpack.c.l.s4 1966171168
    %v109 = vunpack.c.0.s8 %v108
    %v110 = vlaneseq
    %v111 = vshrl.u32 %v110, 7
    %v112 = vsub.s32 %v109, %v111
    %v113 = vrot.slane %v85, %v112
    %v114 = vcombine.high %v92, %v92
    %v115 = vcombine.high %v99, %v99
    %v116 = vcombine.high %v106, %v106
    %v117 = vcombine.high %v113, %v113
    %v118 = vcombine.high %v14, %v14
    %v120 = vunpack.c.l.s4 1966171168
    %v121 = vunpack.c.0.s8 %v120
    %v122 = vlaneseq
    %v123 = vshrl.u32 %v122, 7
    %v124 = vsub.s32 %v121, %v123
    %v125 = vrot.slane %v14, %v124
    %v127 = vunpack.c.l.s4 1966171168
    %v128 = vunpack.c.0.s8 %v127
    %v129 = vlaneseq
    %v130 = vshrl.u32 %v129, 7
    %v131 = vsub.s32 %v128, %v130
    %v132 = vrot.slane %v118, %v131
    %v133 = vcombine.high %v125, %v125
    %v134 = vcombine.high %v132, %v132
    %v136 = vunpack.c.l.s4 1966171168
    %v137 = vunpack.c.0.s8 %v136
    %v138 = vlaneseq
    %v139 = vshrl.u32 %v138, 7
    %v140 = vsub.s32 %v137, %v139
    %v141 = vrot.slane %v125, %v140
    %v143 = vunpack.c.l.s4 1966171168
    %v144 = vunpack.c.0.s8 %v143
    %v145 = vlaneseq
    %v146 = vshrl.u32 %v145, 7
    %v147 = vsub.s32 %v144, %v146
    %v148 = vrot.slane %v132, %v147
    %v150 = vunpack.c.l.s4 1966171168
    %v151 = vunpack.c.0.s8 %v150
    %v152 = vlaneseq
    %v153 = vshrl.u32 %v152, 7
    %v154 = vsub.s32 %v151, %v153
    %v155 = vrot.slane %v133, %v154
    %v157 = vunpack.c.l.s4 1966171168
    %v158 = vunpack.c.0.s8 %v157
    %v159 = vlaneseq
    %v160 = vshrl.u32 %v159, 7
    %v161 = vsub.s32 %v158, %v160
    %v162 = vrot.slane %v134, %v161
    %v163 = vcombine.high %v141, %v141
    %v164 = vcombine.high %v148, %v148
    %v165 = vcombine.high %v155, %v155
    %v166 = vcombine.high %v162, %v162
    %v167 = vcombine.high %v15, %v15
    %v169 = vunpack.c.l.s4 1966171168
    %v170 = vunpack.c.0.s8 %v169
    %v171 = vlaneseq
    %v172 = vshrl.u32 %v171, 7
    %v173 = vsub.s32 %v170, %v172
    %v174 = vrot.slane %v15, %v173
    %v176 = vunpack.c.l.s4 1966171168
    %v177 = vunpack.c.0.s8 %v176
    %v178 = vlaneseq
    %v179 = vshrl.u32 %v178, 7
    %v180 = vsub.s32 %v177, %v179
    %v181 = vrot.slane %v167, %v180
    %v182 = vcombine.high %v174, %v174
    %v183 = vcombine.high %v181, %v181
    %v185 = vunpack.c.l.s4 1966171168
    %v186 = vunpack.c.0.s8 %v185
    %v187 = vlaneseq
    %v188 = vshrl.u32 %v187, 7
    %v189 = vsub.s32 %v186, %v188
    %v190 = vrot.slane %v174, %v189
    %v192 = vunpack.c.l.s4 1966171168
    %v193 = vunpack.c.0.s8 %v192
    %v194 = vlaneseq
    %v195 = vshrl.u32 %v194, 7
    %v196 = vsub.s32 %v193, %v195
    %v197 = vrot.slane %v181, %v196
    %v199 = vunpack.c.l.s4 1966171168
    %v200 = vunpack.c.0.s8 %v199
    %v201 = vlaneseq
    %v202 = vshrl.u32 %v201, 7
    %v203 = vsub.s32 %v200, %v202
    %v204 = vrot.slane %v182, %v203
    %v206 = vunpack.c.l.s4 1966171168
    %v207 = vunpack.c.0.s8 %v206
    %v208 = vlaneseq
    %v209 = vshrl.u32 %v208, 7
    %v210 = vsub.s32 %v207, %v209
    %v211 = vrot.slane %v183, %v210
    %v212 = vcombine.high %v190, %v190
    %v213 = vcombine.high %v197, %v197
    %v214 = vcombine.high %v204, %v204
    %v215 = vcombine.high %v211, %v211
    %v216 = vld [vmem:[%s0] sm:$0x1]
    %217 = vset.pattern.permute.xlu0 0
    %218 = vperm.xlu0 %217, %v43
    %v219 = vpop.permute.xlu0 %218
    %v221 = vlaneseq
    %v222 = vshrl.u32 %v221, 7
    %v223 = vsub.s32 0, %v222
    %v224 = vrot.slane %v219, %v223
    %225 = vset.pattern.permute.xlu0 0
    %226 = vperm.xlu0 %225, %v57
    %v227 = vpop.permute.xlu0 %226
    %v229 = vlaneseq
    %v230 = vshrl.u32 %v229, 7
    %v231 = vsub.s32 0, %v230
    %v232 = vrot.slane %v227, %v231
    %233 = vset.pattern.permute.xlu0 0
    %234 = vperm.xlu0 %233, %v65
    %v235 = vpop.permute.xlu0 %234
    %v237 = vlaneseq
    %v238 = vshrl.u32 %v237, 7
    %v239 = vsub.s32 0, %v238
    %v240 = vrot.slane %v235, %v239
    %241 = vset.pattern.permute.xlu0 0
    %242 = vperm.xlu0 %241, %v67
    %v243 = vpop.permute.xlu0 %242
    %v245 = vlaneseq
    %v246 = vshrl.u32 %v245, 7
    %v247 = vsub.s32 0, %v246
    %v248 = vrot.slane %v243, %v247
    %249 = vset.pattern.permute.xlu0 0
    %250 = vperm.xlu0 %249, %v50
    %v251 = vpop.permute.xlu0 %250
    %v253 = vlaneseq
    %v254 = vshrl.u32 %v253, 7
    %v255 = vsub.s32 0, %v254
    %v256 = vrot.slane %v251, %v255
    %257 = vset.pattern.permute.xlu0 0
    %258 = vperm.xlu0 %257, %v64
    %v259 = vpop.permute.xlu0 %258
    %v261 = vlaneseq
    %v262 = vshrl.u32 %v261, 7
    %v263 = vsub.s32 0, %v262
    %v264 = vrot.slane %v259, %v263
    %265 = vset.pattern.permute.xlu0 0
    %266 = vperm.xlu0 %265, %v66
    %v267 = vpop.permute.xlu0 %266
    %v269 = vlaneseq
    %v270 = vshrl.u32 %v269, 7
    %v271 = vsub.s32 0, %v270
    %v272 = vrot.slane %v267, %v271
    %273 = vset.pattern.permute.xlu0 0
    %274 = vperm.xlu0 %273, %v68
    %v275 = vpop.permute.xlu0 %274
    %v277 = vlaneseq
    %v278 = vshrl.u32 %v277, 7
    %v279 = vsub.s32 0, %v278
    %v280 = vrot.slane %v275, %v279
    %281 = vset.pattern.permute.xlu0 0
    %282 = vperm.xlu0 %281, %v92
    %v283 = vpop.permute.xlu0 %282
    %v285 = vlaneseq
    %v286 = vshrl.u32 %v285, 7
    %v287 = vsub.s32 0, %v286
    %v288 = vrot.slane %v283, %v287
    %289 = vset.pattern.permute.xlu0 0
    %290 = vperm.xlu0 %289, %v106
    %v291 = vpop.permute.xlu0 %290
    %v293 = vlaneseq
    %v294 = vshrl.u32 %v293, 7
    %v295 = vsub.s32 0, %v294
    %v296 = vrot.slane %v291, %v295
    %297 = vset.pattern.permute.xlu0 0
    %298 = vperm.xlu0 %297, %v114
    %v299 = vpop.permute.xlu0 %298
    %v301 = vlaneseq
    %v302 = vshrl.u32 %v301, 7
    %v303 = vsub.s32 0, %v302
    %v304 = vrot.slane %v299, %v303
    %305 = vset.pattern.permute.xlu0 0
    %306 = vperm.xlu0 %305, %v116
    %v307 = vpop.permute.xlu0 %306
    %v309 = vlaneseq
    %v310 = vshrl.u32 %v309, 7
    %v311 = vsub.s32 0, %v310
    %v312 = vrot.slane %v307, %v311
    %313 = vset.pattern.permute.xlu0 0
    %314 = vperm.xlu0 %313, %v99
    %v315 = vpop.permute.xlu0 %314
    %v317 = vlaneseq
    %v318 = vshrl.u32 %v317, 7
    %v319 = vsub.s32 0, %v318
    %v320 = vrot.slane %v315, %v319
    %321 = vset.pattern.permute.xlu0 0
    %322 = vperm.xlu0 %321, %v113
    %v323 = vpop.permute.xlu0 %322
    %v325 = vlaneseq
    %v326 = vshrl.u32 %v325, 7
    %v327 = vsub.s32 0, %v326
    %v328 = vrot.slane %v323, %v327
    %329 = vset.pattern.permute.xlu0 0
    %330 = vperm.xlu0 %329, %v115
    %v331 = vpop.permute.xlu0 %330
    %v333 = vlaneseq
    %v334 = vshrl.u32 %v333, 7
    %v335 = vsub.s32 0, %v334
    %v336 = vrot.slane %v331, %v335
    %337 = vset.pattern.permute.xlu0 0
    %338 = vperm.xlu0 %337, %v117
    %v339 = vpop.permute.xlu0 %338
    %v341 = vlaneseq
    %v342 = vshrl.u32 %v341, 7
    %v343 = vsub.s32 0, %v342
    %v344 = vrot.slane %v339, %v343
    %345 = vset.pattern.permute.xlu0 0
    %346 = vperm.xlu0 %345, %v141
    %v347 = vpop.permute.xlu0 %346
    %v349 = vlaneseq
    %v350 = vshrl.u32 %v349, 7
    %v351 = vsub.s32 0, %v350
    %v352 = vrot.slane %v347, %v351
    %353 = vset.pattern.permute.xlu0 0
    %354 = vperm.xlu0 %353, %v155
    %v355 = vpop.permute.xlu0 %354
    %v357 = vlaneseq
    %v358 = vshrl.u32 %v357, 7
    %v359 = vsub.s32 0, %v358
    %v360 = vrot.slane %v355, %v359
    %361 = vset.pattern.permute.xlu0 0
    %362 = vperm.xlu0 %361, %v163
    %v363 = vpop.permute.xlu0 %362
    %v365 = vlaneseq
    %v366 = vshrl.u32 %v365, 7
    %v367 = vsub.s32 0, %v366
    %v368 = vrot.slane %v363, %v367
    %369 = vset.pattern.permute.xlu0 0
    %370 = vperm.xlu0 %369, %v165
    %v371 = vpop.permute.xlu0 %370
    %v373 = vlaneseq
    %v374 = vshrl.u32 %v373, 7
    %v375 = vsub.s32 0, %v374
    %v376 = vrot.slane %v371, %v375
    %377 = vset.pattern.permute.xlu0 0
    %378 = vperm.xlu0 %377, %v148
    %v379 = vpop.permute.xlu0 %378
    %v381 = vlaneseq
    %v382 = vshrl.u32 %v381, 7
    %v383 = vsub.s32 0, %v382
    %v384 = vrot.slane %v379, %v383
    %385 = vset.pattern.permute.xlu0 0
    %386 = vperm.xlu0 %385, %v162
    %v387 = vpop.permute.xlu0 %386
    %v389 = vlaneseq
    %v390 = vshrl.u32 %v389, 7
    %v391 = vsub.s32 0, %v390
    %v392 = vrot.slane %v387, %v391
    %393 = vset.pattern.permute.xlu0 0
    %394 = vperm.xlu0 %393, %v164
    %v395 = vpop.permute.xlu0 %394
    %v397 = vlaneseq
    %v398 = vshrl.u32 %v397, 7
    %v399 = vsub.s32 0, %v398
    %v400 = vrot.slane %v395, %v399
    %401 = vset.pattern.permute.xlu0 0
    %402 = vperm.xlu0 %401, %v166
    %v403 = vpop.permute.xlu0 %402
    %v405 = vlaneseq
    %v406 = vshrl.u32 %v405, 7
    %v407 = vsub.s32 0, %v406
    %v408 = vrot.slane %v403, %v407
    %409 = vset.pattern.permute.xlu0 0
    %410 = vperm.xlu0 %409, %v190
    %v411 = vpop.permute.xlu0 %410
    %v413 = vlaneseq
    %v414 = vshrl.u32 %v413, 7
    %v415 = vsub.s32 0, %v414
    %v416 = vrot.slane %v411, %v415
    %417 = vset.pattern.permute.xlu0 0
    %418 = vperm.xlu0 %417, %v204
    %v419 = vpop.permute.xlu0 %418
    %v421 = vlaneseq
    %v422 = vshrl.u32 %v421, 7
    %v423 = vsub.s32 0, %v422
    %v424 = vrot.slane %v419, %v423
    %425 = vset.pattern.permute.xlu0 0
    %426 = vperm.xlu0 %425, %v212
    %v427 = vpop.permute.xlu0 %426
    %v429 = vlaneseq
    %v430 = vshrl.u32 %v429, 7
    %v431 = vsub.s32 0, %v430
    %v432 = vrot.slane %v427, %v431
    %433 = vset.pattern.permute.xlu0 0
    %434 = vperm.xlu0 %433, %v214
    %v435 = vpop.permute.xlu0 %434
    %v437 = vlaneseq
    %v438 = vshrl.u32 %v437, 7
    %v439 = vsub.s32 0, %v438
    %v440 = vrot.slane %v435, %v439
    %441 = vset.pattern.permute.xlu0 0
    %442 = vperm.xlu0 %441, %v197
    %v443 = vpop.permute.xlu0 %442
    %v445 = vlaneseq
    %v446 = vshrl.u32 %v445, 7
    %v447 = vsub.s32 0, %v446
    %v448 = vrot.slane %v443, %v447
    %449 = vset.pattern.permute.xlu0 0
    %450 = vperm.xlu0 %449, %v211
    %v451 = vpop.permute.xlu0 %450
    %v453 = vlaneseq
    %v454 = vshrl.u32 %v453, 7
    %v455 = vsub.s32 0, %v454
    %v456 = vrot.slane %v451, %v455
    %457 = vset.pattern.permute.xlu0 0
    %458 = vperm.xlu0 %457, %v213
    %v459 = vpop.permute.xlu0 %458
    %v461 = vlaneseq
    %v462 = vshrl.u32 %v461, 7
    %v463 = vsub.s32 0, %v462
    %v464 = vrot.slane %v459, %v463
    %465 = vset.pattern.permute.xlu0 0
    %466 = vperm.xlu0 %465, %v215
    %v467 = vpop.permute.xlu0 %466
    %v469 = vlaneseq
    %v470 = vshrl.u32 %v469, 7
    %v471 = vsub.s32 0, %v470
    %v472 = vrot.slane %v467, %v471
    %v473 = vmul.f32 %v224, %v216
    %v474 = vmul.f32 %v232, %v216
    %v475 = vmul.f32 %v240, %v216
    %v476 = vmul.f32 %v248, %v216
    %v477 = vmul.f32 %v256, %v216
    %v478 = vmul.f32 %v264, %v216
    %v479 = vmul.f32 %v272, %v216
    %v480 = vmul.f32 %v280, %v216
    %v481 = vmul.f32 %v288, %v216
    %v482 = vmul.f32 %v296, %v216
    %v483 = vmul.f32 %v304, %v216
    %v484 = vmul.f32 %v312, %v216
    %v485 = vmul.f32 %v320, %v216
    %v486 = vmul.f32 %v328, %v216
    %v487 = vmul.f32 %v336, %v216
    %v488 = vmul.f32 %v344, %v216
    %v489 = vmul.f32 %v352, %v216
    %v490 = vmul.f32 %v360, %v216
    %v491 = vmul.f32 %v368, %v216
    %v492 = vmul.f32 %v376, %v216
    %v493 = vmul.f32 %v384, %v216
    %v494 = vmul.f32 %v392, %v216
    %v495 = vmul.f32 %v400, %v216
    %v496 = vmul.f32 %v408, %v216
    %v497 = vmul.f32 %v416, %v216
    %v498 = vmul.f32 %v424, %v216
    %v499 = vmul.f32 %v432, %v216
    %v500 = vmul.f32 %v440, %v216
    %v501 = vmul.f32 %v448, %v216
    %v502 = vmul.f32 %v456, %v216
    %v503 = vmul.f32 %v464, %v216
    %v504 = vmul.f32 %v472, %v216
    %505 = vset.pattern.permute.xlu0 1
    %506 = vperm.xlu0 %505, %v43
    %v507 = vpop.permute.xlu0 %506
    %v509 = vlaneseq
    %v510 = vshrl.u32 %v509, 7
    %v511 = vsub.s32 0, %v510
    %v512 = vrot.slane %v507, %v511
    %513 = vset.pattern.permute.xlu0 1
    %514 = vperm.xlu0 %513, %v57
    %v515 = vpop.permute.xlu0 %514
    %v517 = vlaneseq
    %v518 = vshrl.u32 %v517, 7
    %v519 = vsub.s32 0, %v518
    %v520 = vrot.slane %v515, %v519
    %521 = vset.pattern.permute.xlu0 1
    %522 = vperm.xlu0 %521, %v65
    %v523 = vpop.permute.xlu0 %522
    %v525 = vlaneseq
    %v526 = vshrl.u32 %v525, 7
    %v527 = vsub.s32 0, %v526
    %v528 = vrot.slane %v523, %v527
    %529 = vset.pattern.permute.xlu0 1
    %530 = vperm.xlu0 %529, %v67
    %v531 = vpop.permute.xlu0 %530
    %v533 = vlaneseq
    %v534 = vshrl.u32 %v533, 7
    %v535 = vsub.s32 0, %v534
    %v536 = vrot.slane %v531, %v535
    %537 = vset.pattern.permute.xlu0 1
    %538 = vperm.xlu0 %537, %v50
    %v539 = vpop.permute.xlu0 %538
    %v541 = vlaneseq
    %v542 = vshrl.u32 %v541, 7
    %v543 = vsub.s32 0, %v542
    %v544 = vrot.slane %v539, %v543
    %545 = vset.pattern.permute.xlu0 1
    %546 = vperm.xlu0 %545, %v64
    %v547 = vpop.permute.xlu0 %546
    %v549 = vlaneseq
    %v550 = vshrl.u32 %v549, 7
    %v551 = vsub.s32 0, %v550
    %v552 = vrot.slane %v547, %v551
    %553 = vset.pattern.permute.xlu0 1
    %554 = vperm.xlu0 %553, %v66
    %v555 = vpop.permute.xlu0 %554
    %v557 = vlaneseq
    %v558 = vshrl.u32 %v557, 7
    %v559 = vsub.s32 0, %v558
    %v560 = vrot.slane %v555, %v559
    %561 = vset.pattern.permute.xlu0 1
    %562 = vperm.xlu0 %561, %v68
    %v563 = vpop.permute.xlu0 %562
    %v565 = vlaneseq
    %v566 = vshrl.u32 %v565, 7
    %v567 = vsub.s32 0, %v566
    %v568 = vrot.slane %v563, %v567
    %569 = vset.pattern.permute.xlu0 1
    %570 = vperm.xlu0 %569, %v92
    %v571 = vpop.permute.xlu0 %570
    %v573 = vlaneseq
    %v574 = vshrl.u32 %v573, 7
    %v575 = vsub.s32 0, %v574
    %v576 = vrot.slane %v571, %v575
    %577 = vset.pattern.permute.xlu0 1
    %578 = vperm.xlu0 %577, %v106
    %v579 = vpop.permute.xlu0 %578
    %v581 = vlaneseq
    %v582 = vshrl.u32 %v581, 7
    %v583 = vsub.s32 0, %v582
    %v584 = vrot.slane %v579, %v583
    %585 = vset.pattern.permute.xlu0 1
    %586 = vperm.xlu0 %585, %v114
    %v587 = vpop.permute.xlu0 %586
    %v589 = vlaneseq
    %v590 = vshrl.u32 %v589, 7
    %v591 = vsub.s32 0, %v590
    %v592 = vrot.slane %v587, %v591
    %593 = vset.pattern.permute.xlu0 1
    %594 = vperm.xlu0 %593, %v116
    %v595 = vpop.permute.xlu0 %594
    %v597 = vlaneseq
    %v598 = vshrl.u32 %v597, 7
    %v599 = vsub.s32 0, %v598
    %v600 = vrot.slane %v595, %v599
    %601 = vset.pattern.permute.xlu0 1
    %602 = vperm.xlu0 %601, %v99
    %v603 = vpop.permute.xlu0 %602
    %v605 = vlaneseq
    %v606 = vshrl.u32 %v605, 7
    %v607 = vsub.s32 0, %v606
    %v608 = vrot.slane %v603, %v607
    %609 = vset.pattern.permute.xlu0 1
    %610 = vperm.xlu0 %609, %v113
    %v611 = vpop.permute.xlu0 %610
    %v613 = vlaneseq
    %v614 = vshrl.u32 %v613, 7
    %v615 = vsub.s32 0, %v614
    %v616 = vrot.slane %v611, %v615
    %617 = vset.pattern.permute.xlu0 1
    %618 = vperm.xlu0 %617, %v115
    %v619 = vpop.permute.xlu0 %618
    %v621 = vlaneseq
    %v622 = vshrl.u32 %v621, 7
    %v623 = vsub.s32 0, %v622
    %v624 = vrot.slane %v619, %v623
    %625 = vset.pattern.permute.xlu0 1
    %626 = vperm.xlu0 %625, %v117
    %v627 = vpop.permute.xlu0 %626
    %v629 = vlaneseq
    %v630 = vshrl.u32 %v629, 7
    %v631 = vsub.s32 0, %v630
    %v632 = vrot.slane %v627, %v631
    %633 = vset.pattern.permute.xlu0 1
    %634 = vperm.xlu0 %633, %v141
    %v635 = vpop.permute.xlu0 %634
    %v637 = vlaneseq
    %v638 = vshrl.u32 %v637, 7
    %v639 = vsub.s32 0, %v638
    %v640 = vrot.slane %v635, %v639
    %641 = vset.pattern.permute.xlu0 1
    %642 = vperm.xlu0 %641, %v155
    %v643 = vpop.permute.xlu0 %642
    %v645 = vlaneseq
    %v646 = vshrl.u32 %v645, 7
    %v647 = vsub.s32 0, %v646
    %v648 = vrot.slane %v643, %v647
    %649 = vset.pattern.permute.xlu0 1
    %650 = vperm.xlu0 %649, %v163
    %v651 = vpop.permute.xlu0 %650
    %v653 = vlaneseq
    %v654 = vshrl.u32 %v653, 7
    %v655 = vsub.s32 0, %v654
    %v656 = vrot.slane %v651, %v655
    %657 = vset.pattern.permute.xlu0 1
    %658 = vperm.xlu0 %657, %v165
    %v659 = vpop.permute.xlu0 %658
    %v661 = vlaneseq
    %v662 = vshrl.u32 %v661, 7
    %v663 = vsub.s32 0, %v662
    %v664 = vrot.slane %v659, %v663
    %665 = vset.pattern.permute.xlu0 1
    %666 = vperm.xlu0 %665, %v148
    %v667 = vpop.permute.xlu0 %666
    %v669 = vlaneseq
    %v670 = vshrl.u32 %v669, 7
    %v671 = vsub.s32 0, %v670
    %v672 = vrot.slane %v667, %v671
    %673 = vset.pattern.permute.xlu0 1
    %674 = vperm.xlu0 %673, %v162
    %v675 = vpop.permute.xlu0 %674
    %v677 = vlaneseq
    %v678 = vshrl.u32 %v677, 7
    %v679 = vsub.s32 0, %v678
    %v680 = vrot.slane %v675, %v679
    %681 = vset.pattern.permute.xlu0 1
    %682 = vperm.xlu0 %681, %v164
    %v683 = vpop.permute.xlu0 %682
    %v685 = vlaneseq
    %v686 = vshrl.u32 %v685, 7
    %v687 = vsub.s32 0, %v686
    %v688 = vrot.slane %v683, %v687
    %689 = vset.pattern.permute.xlu0 1
    %690 = vperm.xlu0 %689, %v166
    %v691 = vpop.permute.xlu0 %690
    %v693 = vlaneseq
    %v694 = vshrl.u32 %v693, 7
    %v695 = vsub.s32 0, %v694
    %v696 = vrot.slane %v691, %v695
    %697 = vset.pattern.permute.xlu0 1
    %698 = vperm.xlu0 %697, %v190
    %v699 = vpop.permute.xlu0 %698
    %v701 = vlaneseq
    %v702 = vshrl.u32 %v701, 7
    %v703 = vsub.s32 0, %v702
    %v704 = vrot.slane %v699, %v703
    %705 = vset.pattern.permute.xlu0 1
    %706 = vperm.xlu0 %705, %v204
    %v707 = vpop.permute.xlu0 %706
    %v709 = vlaneseq
    %v710 = vshrl.u32 %v709, 7
    %v711 = vsub.s32 0, %v710
    %v712 = vrot.slane %v707, %v711
    %713 = vset.pattern.permute.xlu0 1
    %714 = vperm.xlu0 %713, %v212
    %v715 = vpop.permute.xlu0 %714
    %v717 = vlaneseq
    %v718 = vshrl.u32 %v717, 7
    %v719 = vsub.s32 0, %v718
    %v720 = vrot.slane %v715, %v719
    %721 = vset.pattern.permute.xlu0 1
    %722 = vperm.xlu0 %721, %v214
    %v723 = vpop.permute.xlu0 %722
    %v725 = vlaneseq
    %v726 = vshrl.u32 %v725, 7
    %v727 = vsub.s32 0, %v726
    %v728 = vrot.slane %v723, %v727
    %729 = vset.pattern.permute.xlu0 1
    %730 = vperm.xlu0 %729, %v197
    %v731 = vpop.permute.xlu0 %730
    %v733 = vlaneseq
    %v734 = vshrl.u32 %v733, 7
    %v735 = vsub.s32 0, %v734
    %v736 = vrot.slane %v731, %v735
    %737 = vset.pattern.permute.xlu0 1
    %738 = vperm.xlu0 %737, %v211
    %v739 = vpop.permute.xlu0 %738
    %v741 = vlaneseq
    %v742 = vshrl.u32 %v741, 7
    %v743 = vsub.s32 0, %v742
    %v744 = vrot.slane %v739, %v743
    %745 = vset.pattern.permute.xlu0 1
    %746 = vperm.xlu0 %745, %v213
    %v747 = vpop.permute.xlu0 %746
    %v749 = vlaneseq
    %v750 = vshrl.u32 %v749, 7
    %v751 = vsub.s32 0, %v750
    %v752 = vrot.slane %v747, %v751
    %753 = vset.pattern.permute.xlu0 1
    %754 = vperm.xlu0 %753, %v215
    %v755 = vpop.permute.xlu0 %754
    %v757 = vlaneseq
    %v758 = vshrl.u32 %v757, 7
    %v759 = vsub.s32 0, %v758
    %v760 = vrot.slane %v755, %v759
    %v761 = vadd.f32 %v473, %v512
    %v762 = vadd.f32 %v474, %v520
    %v763 = vadd.f32 %v475, %v528
    %v764 = vadd.f32 %v476, %v536
    %v765 = vadd.f32 %v477, %v544
    %v766 = vadd.f32 %v478, %v552
    %v767 = vadd.f32 %v479, %v560
    %v768 = vadd.f32 %v480, %v568
    %v769 = vadd.f32 %v481, %v576
    %v770 = vadd.f32 %v482, %v584
    %v771 = vadd.f32 %v483, %v592
    %v772 = vadd.f32 %v484, %v600
    %v773 = vadd.f32 %v485, %v608
    %v774 = vadd.f32 %v486, %v616
    %v775 = vadd.f32 %v487, %v624
    %v776 = vadd.f32 %v488, %v632
    %v777 = vadd.f32 %v489, %v640
    %v778 = vadd.f32 %v490, %v648
    %v779 = vadd.f32 %v491, %v656
    %v780 = vadd.f32 %v492, %v664
    %v781 = vadd.f32 %v493, %v672
    %v782 = vadd.f32 %v494, %v680
    %v783 = vadd.f32 %v495, %v688
    %v784 = vadd.f32 %v496, %v696
    %v785 = vadd.f32 %v497, %v704
    %v786 = vadd.f32 %v498, %v712
    %v787 = vadd.f32 %v499, %v720
    %v788 = vadd.f32 %v500, %v728
    %v789 = vadd.f32 %v501, %v736
    %v790 = vadd.f32 %v502, %v744
    %v791 = vadd.f32 %v503, %v752
    %v792 = vadd.f32 %v504, %v760
    %v793 = vmul.f32 %v761, 0.5
    %v794 = vmul.f32 %v762, 0.5
    %v795 = vmul.f32 %v763, 0.5
    %v796 = vmul.f32 %v764, 0.5
    %v797 = vmul.f32 %v765, 0.5
    %v798 = vmul.f32 %v766, 0.5
    %v799 = vmul.f32 %v767, 0.5
    %v800 = vmul.f32 %v768, 0.5
    %v801 = vmul.f32 %v769, 0.5
    %v802 = vmul.f32 %v770, 0.5
    %v803 = vmul.f32 %v771, 0.5
    %v804 = vmul.f32 %v772, 0.5
    %v805 = vmul.f32 %v773, 0.5
    %v806 = vmul.f32 %v774, 0.5
    %v807 = vmul.f32 %v775, 0.5
    %v808 = vmul.f32 %v776, 0.5
    %v809 = vmul.f32 %v777, 0.5
    %v810 = vmul.f32 %v778, 0.5
    %v811 = vmul.f32 %v779, 0.5
    %v812 = vmul.f32 %v780, 0.5
    %v813 = vmul.f32 %v781, 0.5
    %v814 = vmul.f32 %v782, 0.5
    %v815 = vmul.f32 %v783, 0.5
    %v816 = vmul.f32 %v784, 0.5
    %v817 = vmul.f32 %v785, 0.5
    %v818 = vmul.f32 %v786, 0.5
    %v819 = vmul.f32 %v787, 0.5
    %v820 = vmul.f32 %v788, 0.5
    %v821 = vmul.f32 %v789, 0.5
    %v822 = vmul.f32 %v790, 0.5
    %v823 = vmul.f32 %v791, 0.5
    %v824 = vmul.f32 %v792, 0.5
    %v825 = vtanh.pop %v793
    %v826 = vtanh.pop %v794
    %v827 = vtanh.pop %v795
    %v828 = vtanh.pop %v796
    %v829 = vtanh.pop %v797
    %v830 = vtanh.pop %v798
    %v831 = vtanh.pop %v799
    %v832 = vtanh.pop %v800
    %v833 = vtanh.pop %v801
    %v834 = vtanh.pop %v802
    %v835 = vtanh.pop %v803
    %v836 = vtanh.pop %v804
    %v837 = vtanh.pop %v805
    %v838 = vtanh.pop %v806
    %v839 = vtanh.pop %v807
    %v840 = vtanh.pop %v808
    %v841 = vtanh.pop %v809
    %v842 = vtanh.pop %v810
    %v843 = vtanh.pop %v811
    %v844 = vtanh.pop %v812
    %v845 = vtanh.pop %v813
    %v846 = vtanh.pop %v814
    %v847 = vtanh.pop %v815
    %v848 = vtanh.pop %v816
    %v849 = vtanh.pop %v817
    %v850 = vtanh.pop %v818
    %v851 = vtanh.pop %v819
    %v852 = vtanh.pop %v820
    %v853 = vtanh.pop %v821
    %v854 = vtanh.pop %v822
    %v855 = vtanh.pop %v823
    %v856 = vtanh.pop %v824
    %v857 = vmul.f32 %v825, 0.5
    %v858 = vmul.f32 %v826, 0.5
    %v859 = vmul.f32 %v827, 0.5
    %v860 = vmul.f32 %v828, 0.5
    %v861 = vmul.f32 %v829, 0.5
    %v862 = vmul.f32 %v830, 0.5
    %v863 = vmul.f32 %v831, 0.5
    %v864 = vmul.f32 %v832, 0.5
    %v865 = vmul.f32 %v833, 0.5
    %v866 = vmul.f32 %v834, 0.5
    %v867 = vmul.f32 %v835, 0.5
    %v868 = vmul.f32 %v836, 0.5
    %v869 = vmul.f32 %v837, 0.5
    %v870 = vmul.f32 %v838, 0.5
    %v871 = vmul.f32 %v839, 0.5
    %v872 = vmul.f32 %v840, 0.5
    %v873 = vmul.f32 %v841, 0.5
    %v874 = vmul.f32 %v842, 0.5
    %v875 = vmul.f32 %v843, 0.5
    %v876 = vmul.f32 %v844, 0.5
    %v877 = vmul.f32 %v845, 0.5
    %v878 = vmul.f32 %v846, 0.5
    %v879 = vmul.f32 %v847, 0.5
    %v880 = vmul.f32 %v848, 0.5
    %v881 = vmul.f32 %v849, 0.5
    %v882 = vmul.f32 %v850, 0.5
    %v883 = vmul.f32 %v851, 0.5
    %v884 = vmul.f32 %v852, 0.5
    %v885 = vmul.f32 %v853, 0.5
    %v886 = vmul.f32 %v854, 0.5
    %v887 = vmul.f32 %v855, 0.5
    %v888 = vmul.f32 %v856, 0.5
    %v889 = vadd.f32 %v857, 0.5
    %v890 = vadd.f32 %v858, 0.5
    %v891 = vadd.f32 %v859, 0.5
    %v892 = vadd.f32 %v860, 0.5
    %v893 = vadd.f32 %v861, 0.5
    %v894 = vadd.f32 %v862, 0.5
    %v895 = vadd.f32 %v863, 0.5
    %v896 = vadd.f32 %v864, 0.5
    %v897 = vadd.f32 %v865, 0.5
    %v898 = vadd.f32 %v866, 0.5
    %v899 = vadd.f32 %v867, 0.5
    %v900 = vadd.f32 %v868, 0.5
    %v901 = vadd.f32 %v869, 0.5
    %v902 = vadd.f32 %v870, 0.5
    %v903 = vadd.f32 %v871, 0.5
    %v904 = vadd.f32 %v872, 0.5
    %v905 = vadd.f32 %v873, 0.5
    %v906 = vadd.f32 %v874, 0.5
    %v907 = vadd.f32 %v875, 0.5
    %v908 = vadd.f32 %v876, 0.5
    %v909 = vadd.f32 %v877, 0.5
    %v910 = vadd.f32 %v878, 0.5
    %v911 = vadd.f32 %v879, 0.5
    %v912 = vadd.f32 %v880, 0.5
    %v913 = vadd.f32 %v881, 0.5
    %v914 = vadd.f32 %v882, 0.5
    %v915 = vadd.f32 %v883, 0.5
    %v916 = vadd.f32 %v884, 0.5
    %v917 = vadd.f32 %v885, 0.5
    %v918 = vadd.f32 %v886, 0.5
    %v919 = vadd.f32 %v887, 0.5
    %v920 = vadd.f32 %v888, 0.5
    %921 = vset.pattern.permute.xlu0 2
    %922 = vperm.xlu0 %921, %v43
    %v923 = vpop.permute.xlu0 %922
    %v925 = vlaneseq
    %v926 = vshrl.u32 %v925, 7
    %v927 = vsub.s32 0, %v926
    %v928 = vrot.slane %v923, %v927
    %929 = vset.pattern.permute.xlu0 2
    %930 = vperm.xlu0 %929, %v57
    %v931 = vpop.permute.xlu0 %930
    %v933 = vlaneseq
    %v934 = vshrl.u32 %v933, 7
    %v935 = vsub.s32 0, %v934
    %v936 = vrot.slane %v931, %v935
    %937 = vset.pattern.permute.xlu0 2
    %938 = vperm.xlu0 %937, %v65
    %v939 = vpop.permute.xlu0 %938
    %v941 = vlaneseq
    %v942 = vshrl.u32 %v941, 7
    %v943 = vsub.s32 0, %v942
    %v944 = vrot.slane %v939, %v943
    %945 = vset.pattern.permute.xlu0 2
    %946 = vperm.xlu0 %945, %v67
    %v947 = vpop.permute.xlu0 %946
    %v949 = vlaneseq
    %v950 = vshrl.u32 %v949, 7
    %v951 = vsub.s32 0, %v950
    %v952 = vrot.slane %v947, %v951
    %953 = vset.pattern.permute.xlu0 2
    %954 = vperm.xlu0 %953, %v50
    %v955 = vpop.permute.xlu0 %954
    %v957 = vlaneseq
    %v958 = vshrl.u32 %v957, 7
    %v959 = vsub.s32 0, %v958
    %v960 = vrot.slane %v955, %v959
    %961 = vset.pattern.permute.xlu0 2
    %962 = vperm.xlu0 %961, %v64
    %v963 = vpop.permute.xlu0 %962
    %v965 = vlaneseq
    %v966 = vshrl.u32 %v965, 7
    %v967 = vsub.s32 0, %v966
    %v968 = vrot.slane %v963, %v967
    %969 = vset.pattern.permute.xlu0 2
    %970 = vperm.xlu0 %969, %v66
    %v971 = vpop.permute.xlu0 %970
    %v973 = vlaneseq
    %v974 = vshrl.u32 %v973, 7
    %v975 = vsub.s32 0, %v974
    %v976 = vrot.slane %v971, %v975
    %977 = vset.pattern.permute.xlu0 2
    %978 = vperm.xlu0 %977, %v68
    %v979 = vpop.permute.xlu0 %978
    %v981 = vlaneseq
    %v982 = vshrl.u32 %v981, 7
    %v983 = vsub.s32 0, %v982
    %v984 = vrot.slane %v979, %v983
    %985 = vset.pattern.permute.xlu0 2
    %986 = vperm.xlu0 %985, %v92
    %v987 = vpop.permute.xlu0 %986
    %v989 = vlaneseq
    %v990 = vshrl.u32 %v989, 7
    %v991 = vsub.s32 0, %v990
    %v992 = vrot.slane %v987, %v991
    %993 = vset.pattern.permute.xlu0 2
    %994 = vperm.xlu0 %993, %v106
    %v995 = vpop.permute.xlu0 %994
    %v997 = vlaneseq
    %v998 = vshrl.u32 %v997, 7
    %v999 = vsub.s32 0, %v998
    %v1000 = vrot.slane %v995, %v999
    %1001 = vset.pattern.permute.xlu0 2
    %1002 = vperm.xlu0 %1001, %v114
    %v1003 = vpop.permute.xlu0 %1002
    %v1005 = vlaneseq
    %v1006 = vshrl.u32 %v1005, 7
    %v1007 = vsub.s32 0, %v1006
    %v1008 = vrot.slane %v1003, %v1007
    %1009 = vset.pattern.permute.xlu0 2
    %1010 = vperm.xlu0 %1009, %v116
    %v1011 = vpop.permute.xlu0 %1010
    %v1013 = vlaneseq
    %v1014 = vshrl.u32 %v1013, 7
    %v1015 = vsub.s32 0, %v1014
    %v1016 = vrot.slane %v1011, %v1015
    %1017 = vset.pattern.permute.xlu0 2
    %1018 = vperm.xlu0 %1017, %v99
    %v1019 = vpop.permute.xlu0 %1018
    %v1021 = vlaneseq
    %v1022 = vshrl.u32 %v1021, 7
    %v1023 = vsub.s32 0, %v1022
    %v1024 = vrot.slane %v1019, %v1023
    %1025 = vset.pattern.permute.xlu0 2
    %1026 = vperm.xlu0 %1025, %v113
    %v1027 = vpop.permute.xlu0 %1026
    %v1029 = vlaneseq
    %v1030 = vshrl.u32 %v1029, 7
    %v1031 = vsub.s32 0, %v1030
    %v1032 = vrot.slane %v1027, %v1031
    %1033 = vset.pattern.permute.xlu0 2
    %1034 = vperm.xlu0 %1033, %v115
    %v1035 = vpop.permute.xlu0 %1034
    %v1037 = vlaneseq
    %v1038 = vshrl.u32 %v1037, 7
    %v1039 = vsub.s32 0, %v1038
    %v1040 = vrot.slane %v1035, %v1039
    %1041 = vset.pattern.permute.xlu0 2
    %1042 = vperm.xlu0 %1041, %v117
    %v1043 = vpop.permute.xlu0 %1042
    %v1045 = vlaneseq
    %v1046 = vshrl.u32 %v1045, 7
    %v1047 = vsub.s32 0, %v1046
    %v1048 = vrot.slane %v1043, %v1047
    %1049 = vset.pattern.permute.xlu0 2
    %1050 = vperm.xlu0 %1049, %v141
    %v1051 = vpop.permute.xlu0 %1050
    %v1053 = vlaneseq
    %v1054 = vshrl.u32 %v1053, 7
    %v1055 = vsub.s32 0, %v1054
    %v1056 = vrot.slane %v1051, %v1055
    %1057 = vset.pattern.permute.xlu0 2
    %1058 = vperm.xlu0 %1057, %v155
    %v1059 = vpop.permute.xlu0 %1058
    %v1061 = vlaneseq
    %v1062 = vshrl.u32 %v1061, 7
    %v1063 = vsub.s32 0, %v1062
    %v1064 = vrot.slane %v1059, %v1063
    %1065 = vset.pattern.permute.xlu0 2
    %1066 = vperm.xlu0 %1065, %v163
    %v1067 = vpop.permute.xlu0 %1066
    %v1069 = vlaneseq
    %v1070 = vshrl.u32 %v1069, 7
    %v1071 = vsub.s32 0, %v1070
    %v1072 = vrot.slane %v1067, %v1071
    %1073 = vset.pattern.permute.xlu0 2
    %1074 = vperm.xlu0 %1073, %v165
    %v1075 = vpop.permute.xlu0 %1074
    %v1077 = vlaneseq
    %v1078 = vshrl.u32 %v1077, 7
    %v1079 = vsub.s32 0, %v1078
    %v1080 = vrot.slane %v1075, %v1079
    %1081 = vset.pattern.permute.xlu0 2
    %1082 = vperm.xlu0 %1081, %v148
    %v1083 = vpop.permute.xlu0 %1082
    %v1085 = vlaneseq
    %v1086 = vshrl.u32 %v1085, 7
    %v1087 = vsub.s32 0, %v1086
    %v1088 = vrot.slane %v1083, %v1087
    %1089 = vset.pattern.permute.xlu0 2
    %1090 = vperm.xlu0 %1089, %v162
    %v1091 = vpop.permute.xlu0 %1090
    %v1093 = vlaneseq
    %v1094 = vshrl.u32 %v1093, 7
    %v1095 = vsub.s32 0, %v1094
    %v1096 = vrot.slane %v1091, %v1095
    %1097 = vset.pattern.permute.xlu0 2
    %1098 = vperm.xlu0 %1097, %v164
    %v1099 = vpop.permute.xlu0 %1098
    %v1101 = vlaneseq
    %v1102 = vshrl.u32 %v1101, 7
    %v1103 = vsub.s32 0, %v1102
    %v1104 = vrot.slane %v1099, %v1103
    %1105 = vset.pattern.permute.xlu0 2
    %1106 = vperm.xlu0 %1105, %v166
    %v1107 = vpop.permute.xlu0 %1106
    %v1109 = vlaneseq
    %v1110 = vshrl.u32 %v1109, 7
    %v1111 = vsub.s32 0, %v1110
    %v1112 = vrot.slane %v1107, %v1111
    %1113 = vset.pattern.permute.xlu0 2
    %1114 = vperm.xlu0 %1113, %v190
    %v1115 = vpop.permute.xlu0 %1114
    %v1117 = vlaneseq
    %v1118 = vshrl.u32 %v1117, 7
    %v1119 = vsub.s32 0, %v1118
    %v1120 = vrot.slane %v1115, %v1119
    %1121 = vset.pattern.permute.xlu0 2
    %1122 = vperm.xlu0 %1121, %v204
    %v1123 = vpop.permute.xlu0 %1122
    %v1125 = vlaneseq
    %v1126 = vshrl.u32 %v1125, 7
    %v1127 = vsub.s32 0, %v1126
    %v1128 = vrot.slane %v1123, %v1127
    %1129 = vset.pattern.permute.xlu0 2
    %1130 = vperm.xlu0 %1129, %v212
    %v1131 = vpop.permute.xlu0 %1130
    %v1133 = vlaneseq
    %v1134 = vshrl.u32 %v1133, 7
    %v1135 = vsub.s32 0, %v1134
    %v1136 = vrot.slane %v1131, %v1135
    %1137 = vset.pattern.permute.xlu0 2
    %1138 = vperm.xlu0 %1137, %v214
    %v1139 = vpop.permute.xlu0 %1138
    %v1141 = vlaneseq
    %v1142 = vshrl.u32 %v1141, 7
    %v1143 = vsub.s32 0, %v1142
    %v1144 = vrot.slane %v1139, %v1143
    %1145 = vset.pattern.permute.xlu0 2
    %1146 = vperm.xlu0 %1145, %v197
    %v1147 = vpop.permute.xlu0 %1146
    %v1149 = vlaneseq
    %v1150 = vshrl.u32 %v1149, 7
    %v1151 = vsub.s32 0, %v1150
    %v1152 = vrot.slane %v1147, %v1151
    %1153 = vset.pattern.permute.xlu0 2
    %1154 = vperm.xlu0 %1153, %v211
    %v1155 = vpop.permute.xlu0 %1154
    %v1157 = vlaneseq
    %v1158 = vshrl.u32 %v1157, 7
    %v1159 = vsub.s32 0, %v1158
    %v1160 = vrot.slane %v1155, %v1159
    %1161 = vset.pattern.permute.xlu0 2
    %1162 = vperm.xlu0 %1161, %v213
    %v1163 = vpop.permute.xlu0 %1162
    %v1165 = vlaneseq
    %v1166 = vshrl.u32 %v1165, 7
    %v1167 = vsub.s32 0, %v1166
    %v1168 = vrot.slane %v1163, %v1167
    %1169 = vset.pattern.permute.xlu0 2
    %1170 = vperm.xlu0 %1169, %v215
    %v1171 = vpop.permute.xlu0 %1170
    %v1173 = vlaneseq
    %v1174 = vshrl.u32 %v1173, 7
    %v1175 = vsub.s32 0, %v1174
    %v1176 = vrot.slane %v1171, %v1175
    %v1177 = vmul.f32 %v928, %v889
    %v1178 = vmul.f32 %v936, %v890
    %v1179 = vmul.f32 %v944, %v891
    %v1180 = vmul.f32 %v952, %v892
    %v1181 = vmul.f32 %v960, %v893
    %v1182 = vmul.f32 %v968, %v894
    %v1183 = vmul.f32 %v976, %v895
    %v1184 = vmul.f32 %v984, %v896
    %v1185 = vmul.f32 %v992, %v897
    %v1186 = vmul.f32 %v1000, %v898
    %v1187 = vmul.f32 %v1008, %v899
    %v1188 = vmul.f32 %v1016, %v900
    %v1189 = vmul.f32 %v1024, %v901
    %v1190 = vmul.f32 %v1032, %v902
    %v1191 = vmul.f32 %v1040, %v903
    %v1192 = vmul.f32 %v1048, %v904
    %v1193 = vmul.f32 %v1056, %v905
    %v1194 = vmul.f32 %v1064, %v906
    %v1195 = vmul.f32 %v1072, %v907
    %v1196 = vmul.f32 %v1080, %v908
    %v1197 = vmul.f32 %v1088, %v909
    %v1198 = vmul.f32 %v1096, %v910
    %v1199 = vmul.f32 %v1104, %v911
    %v1200 = vmul.f32 %v1112, %v912
    %v1201 = vmul.f32 %v1120, %v913
    %v1202 = vmul.f32 %v1128, %v914
    %v1203 = vmul.f32 %v1136, %v915
    %v1204 = vmul.f32 %v1144, %v916
    %v1205 = vmul.f32 %v1152, %v917
    %v1206 = vmul.f32 %v1160, %v918
    %v1207 = vmul.f32 %v1168, %v919
    %v1208 = vmul.f32 %v1176, %v920
    %vm1209 = vcmask 1040384
    %v1210 = vsel %vm1209, %v1177, 0.0
    %v1211 = vsel %vm1209, %v1178, 0.0
    %v1212 = vadd.f32 %v1210, %v1211
    %v1213 = vsel %vm1209, %v1179, 0.0
    %v1214 = vadd.f32 %v1212, %v1213
    %v1215 = vsel %vm1209, %v1180, 0.0
    %v1216 = vadd.f32 %v1214, %v1215
    %v1217 = vsel %vm1209, %v1181, 0.0
    %v1218 = vadd.f32 %v1216, %v1217
    %v1219 = vsel %vm1209, %v1182, 0.0
    %v1220 = vadd.f32 %v1218, %v1219
    %v1221 = vsel %vm1209, %v1183, 0.0
    %v1222 = vadd.f32 %v1220, %v1221
    %v1223 = vsel %vm1209, %v1184, 0.0
    %v1224 = vadd.f32 %v1222, %v1223
    %v1225 = vsel %vm1209, %v1185, 0.0
    %v1226 = vadd.f32 %v1224, %v1225
    %v1227 = vsel %vm1209, %v1186, 0.0
    %v1228 = vadd.f32 %v1226, %v1227
    %v1229 = vsel %vm1209, %v1187, 0.0
    %v1230 = vadd.f32 %v1228, %v1229
    %v1231 = vsel %vm1209, %v1188, 0.0
    %v1232 = vadd.f32 %v1230, %v1231
    %v1233 = vsel %vm1209, %v1189, 0.0
    %v1234 = vadd.f32 %v1232, %v1233
    %v1235 = vsel %vm1209, %v1190, 0.0
    %v1236 = vadd.f32 %v1234, %v1235
    %v1237 = vsel %vm1209, %v1191, 0.0
    %v1238 = vadd.f32 %v1236, %v1237
    %v1239 = vsel %vm1209, %v1192, 0.0
    %v1240 = vadd.f32 %v1238, %v1239
    %v1241 = vsel %vm1209, %v1193, 0.0
    %v1242 = vadd.f32 %v1240, %v1241
    %v1243 = vsel %vm1209, %v1194, 0.0
    %v1244 = vadd.f32 %v1242, %v1243
    %v1245 = vsel %vm1209, %v1195, 0.0
    %v1246 = vadd.f32 %v1244, %v1245
    %v1247 = vsel %vm1209, %v1196, 0.0
    %v1248 = vadd.f32 %v1246, %v1247
    %v1249 = vsel %vm1209, %v1197, 0.0
    %v1250 = vadd.f32 %v1248, %v1249
    %v1251 = vsel %vm1209, %v1198, 0.0
    %v1252 = vadd.f32 %v1250, %v1251
    %v1253 = vsel %vm1209, %v1199, 0.0
    %v1254 = vadd.f32 %v1252, %v1253
    %v1255 = vsel %vm1209, %v1200, 0.0
    %v1256 = vadd.f32 %v1254, %v1255
    %v1257 = vsel %vm1209, %v1201, 0.0
    %v1258 = vadd.f32 %v1256, %v1257
    %v1259 = vsel %vm1209, %v1202, 0.0
    %v1260 = vadd.f32 %v1258, %v1259
    %v1261 = vsel %vm1209, %v1203, 0.0
    %v1262 = vadd.f32 %v1260, %v1261
    %v1263 = vsel %vm1209, %v1204, 0.0
    %v1264 = vadd.f32 %v1262, %v1263
    %v1265 = vsel %vm1209, %v1205, 0.0
    %v1266 = vadd.f32 %v1264, %v1265
    %v1267 = vsel %vm1209, %v1206, 0.0
    %v1268 = vadd.f32 %v1266, %v1267
    %v1269 = vsel %vm1209, %v1207, 0.0
    %v1270 = vadd.f32 %v1268, %v1269
    %v1271 = vsel %vm1209, %v1208, 0.0
    %v1272 = vadd.f32 %v1270, %v1271
    %1273 = vset.pattern.permute.xlu0 3
    %1274 = vperm.xlu0 %1273, %v12
    %v1275 = vpop.permute.xlu0 %1274
    %v1277 = vadd.f32 %v1272, %v1275
    %1278 = vst [vmem:[#allocation2] sm:$0x1] %v1277
    // Predicated region
    $region10: #{tpu_custom_call.1} parent=1 // pred_check
      _
    $region11: #{tpu_custom_call.1} parent=1 // pred_check_branch
      %1280 = sbr.rel (0) target = $region13
    $region12: #{tpu_custom_call.1} parent=1 // pred_region
      %s1282 = ssub.s32 16, 16
      %1283 = vsyncadd [#allocation3], %s1282
      %s1285 = sshll.u32 [#allocation2], 4
      %s1286 = int_to_ptr.vmem [resolvable:$true] %s1285
      %1288 = dma.vmem_to_hbm [thread:$0]  %s1286, 16, %s2, [#allocation3]
    $region13: #{tpu_custom_call.1} parent=1 // pred_fallthru
      _
    // Predicated region
    $region14: #{tpu_custom_call.1} parent=1 // pred_check
      _
    $region15: #{tpu_custom_call.1} parent=1 // pred_check_branch
      %1290 = sbr.rel (0) target = $region17
    $region16: #{tpu_custom_call.1} parent=1 // pred_region
      %1291 = dma.done [#allocation3], 16
    $region17: #{tpu_custom_call.1} parent=1 // pred_fallthru
      _
    %1292 = vsyncpa [#allocation3], 1

</llo_original>
